<compile_context>
chip_gen: v7x
topology: tpu7x:2x2x1
jax: 0.10.0
libtpu: 0.0.40
codegen_flags: <defaults>
</compile_context>

<pallas_src>
import jax
import jax.numpy as jnp
from jax.experimental import pallas as pl
from jax.experimental.pallas import tpu as pltpu

HIDDEN = 256
SUBLANE = 8
MAX_TILE = 4096


def _round_up(x, m):
    return (x + m - 1) // m * m


def _mlp_kernel(x_ref, w1_ref, b1_ref, w2_ref, b2_ref, o_ref):
    # fc1: cast x to bf16 in-kernel (saves a wrapper HBM pass), MXU matmul with
    # f32 accumulation; bias add + ReLU stay in f32 on the VPU.
    x = x_ref[...].astype(jnp.bfloat16)
    h = jnp.dot(x, w1_ref[...], preferred_element_type=jnp.float32)
    h = jnp.maximum(h + b1_ref[...], 0.0)
    # fc2: ReLU(h) back to bf16 for the MXU, bias in f32, cast at the store.
    y = jnp.dot(h.astype(jnp.bfloat16), w2_ref[...],
                preferred_element_type=jnp.float32)
    o_ref[...] = (y + b2_ref[...]).astype(o_ref.dtype)


def prepare_params(w1, b1, w2, b2):
    """One-time parameter preparation (call once, reuse across forwards):
    bf16 weights for the MXU, f32 biases with shape [1, out_features]."""
    in_dim, hidden = w1.shape
    assert hidden == HIDDEN and w2.shape[0] == HIDDEN
    out_dim = w2.shape[1]
    return (
        w1.astype(jnp.bfloat16),
        b1.reshape(1, HIDDEN).astype(jnp.float32),
        w2.astype(jnp.bfloat16),
        b2.reshape(1, out_dim).astype(jnp.float32),
    )


def _vmem_capacity_bytes():
    try:
        info = pltpu.get_tpu_info()
        return int(getattr(info, "vmem_capacity_bytes", 64 << 20))
    except Exception:
        return 64 << 20  # conservative: v7x physical VMEM


def _choose_batch_tile(B, in_dim, out_dim, out_itemsize, vmem_cap):
    """Largest batch tile that fits a fraction of this generation's VMEM."""
    budget = int(vmem_cap * 0.6)  # headroom for compiler scratch / pipelining
    # Resident (constant index_map -> effectively single-buffered).
    resident = (in_dim * HIDDEN * 2 + HIDDEN * out_dim * 2
                + (HIDDEN + out_dim) * 4)
    # Per-row streamed + in-kernel temporaries.
    per_row = (2 * in_dim * 4                 # x, f32, double-buffered
               + 2 * out_dim * out_itemsize   # out, double-buffered
               + in_dim * 2                   # x bf16 temp
               + HIDDEN * 6                   # h f32 + h bf16 temps
               + out_dim * 4)                 # y f32 temp
    avail = max(budget - resident, 1 << 20)
    tb = max(SUBLANE, min(avail // per_row, MAX_TILE))
    if tb >= 16:
        tb = (tb // 16) * 16                  # friendly to bf16 sublane packing
    # Keep >=2 grid steps on large batches so v7x's two TCs both get work.
    if B >= 512:
        tb = min(tb, _round_up((B + 1) // 2, 16))
    tb = min(tb, _round_up(B, SUBLANE))
    return int(tb), resident, per_row


def scalar_encoder_forward(x, params, *, out_dtype=jnp.bfloat16,
                           batch_tile=None):
    """x: [B, input_dim] f32; params = prepare_params(...) output.
    Returns [B, output_dim] in `out_dtype` (default bf16)."""
    w1, b1, w2, b2 = params
    B, in_dim = x.shape
    assert w1.shape == (in_dim, HIDDEN)
    out_dim = w2.shape[1]
    out_itemsize = jnp.dtype(out_dtype).itemsize

    vmem_cap = _vmem_capacity_bytes()
    if batch_tile is not None:
        tb = max(SUBLANE, _round_up(min(batch_tile, _round_up(B, SUBLANE)),
                                    SUBLANE))
        _, resident, per_row = _choose_batch_tile(B, in_dim, out_dim,
                                                  out_itemsize, vmem_cap)
    else:
        tb, resident, per_row = _choose_batch_tile(B, in_dim, out_dim,
                                                   out_itemsize, vmem_cap)

    grid = (pl.cdiv(B, tb),)

    # Tight VMEM estimate for the chosen tile; small multiplier for headroom.
    vmem_estimate = resident + tb * per_row
    vmem_limit = min(max(int(vmem_estimate * 1.3) + (2 << 20), 16 << 20),
                     vmem_cap)

    out = pl.pallas_call(
        _mlp_kernel,
        out_shape=jax.ShapeDtypeStruct((B, out_dim), out_dtype),
        grid_spec=pltpu.PrefetchScalarGridSpec(
            num_scalar_prefetch=0,
            grid=grid,
            in_specs=[
                pl.BlockSpec((tb, in_dim), lambda i: (i, 0)),       # streamed
                pl.BlockSpec((in_dim, HIDDEN), lambda i: (0, 0)),   # resident
                pl.BlockSpec((1, HIDDEN), lambda i: (0, 0)),        # resident
                pl.BlockSpec((HIDDEN, out_dim), lambda i: (0, 0)),  # resident
                pl.BlockSpec((1, out_dim), lambda i: (0, 0)),       # resident
            ],
            out_specs=pl.BlockSpec((tb, out_dim), lambda i: (i, 0)),
        ),
        compiler_params=pltpu.CompilerParams(
            dimension_semantics=("parallel",),
            vmem_limit_bytes=vmem_limit,
        ),
    )(x, w1, b1, w2, b2)

    return out


def init_params(key, input_dim, output_dim):
    """Matches the PyTorch module's init: kaiming_normal_(fan_out, relu) on
    Linear weights (std = sqrt(2 / out_features)); default PyTorch Linear bias
    init U(-1/sqrt(fan_in), 1/sqrt(fan_in)).  Weights stored as [in, out]."""
    k1, k2, k3, k4 = jax.random.split(key, 4)

    std1 = (2.0 / HIDDEN) ** 0.5
    w1 = std1 * jax.random.normal(k1, (input_dim, HIDDEN), dtype=jnp.float32)
    bound1 = 1.0 / (input_dim ** 0.5)
    b1 = jax.random.uniform(k2, (1, HIDDEN), minval=-bound1, maxval=bound1,
                            dtype=jnp.float32)

    std2 = (2.0 / output_dim) ** 0.5
    w2 = std2 * jax.random.normal(k3, (HIDDEN, output_dim), dtype=jnp.float32)
    bound2 = 1.0 / (HIDDEN ** 0.5)
    b2 = jax.random.uniform(k4, (1, output_dim), minval=-bound2, maxval=bound2,
                            dtype=jnp.float32)
    return w1, b1, w2, b2


if __name__ == "__main__":
    key = jax.random.PRNGKey(0)
    kx, kp = jax.random.split(key)

    batch = 8
    input_dim = 32
    output_dim = 64

    x = jax.random.normal(kx, (batch, input_dim), dtype=jnp.float32)
    w1, b1, w2, b2 = init_params(kp, input_dim, output_dim)
    params = prepare_params(w1, b1, w2, b2)   # one-time cast (cache & reuse)

    # Default path: bf16 output (fewest HBM store bytes).
    out_bf16 = scalar_encoder_forward(x, params)
    out_bf16 = jax.block_until_ready(out_bf16)
    assert out_bf16.shape == (batch, output_dim)
    assert out_bf16.dtype == jnp.bfloat16

    # f32-output path for tighter numeric checks.
    out_f32 = scalar_encoder_forward(x, params, out_dtype=jnp.float32)
    out_f32 = jax.block_until_ready(out_f32)
    assert out_f32.shape == (batch, output_dim)

    # Reference 1: bf16-operand / f32-accumulate math (matches kernel dtypes).
    ref_bf = jnp.maximum(
        jnp.dot(x.astype(jnp.bfloat16), w1.astype(jnp.bfloat16),
                preferred_element_type=jnp.float32) + b1, 0.0)
    ref_bf = jnp.dot(ref_bf.astype(jnp.bfloat16), w2.astype(jnp.bfloat16),
                     preferred_element_type=jnp.float32) + b2
    assert jnp.allclose(out_f32, ref_bf, atol=1e-2, rtol=1e-2)

    # Reference 2: full f32 math (module semantics), looser tolerance for bf16.
    ref_f32 = jnp.maximum(x @ w1 + b1, 0.0) @ w2 + b2
    assert jnp.allclose(out_f32, ref_f32, atol=5e-2, rtol=5e-2)
    assert jnp.allclose(out_bf16.astype(jnp.float32), ref_f32,
                        atol=1e-1, rtol=5e-2)

    print("KERNEL_OK")
</pallas_src>

<mosaic_0001>
module attributes {stable_mosaic.version = 11 : i64} {
  func.func @_mlp_kernel(%arg0: i32, %arg1: memref<8x32xf32, #tpu.memory_space<vmem>>, %arg2: memref<32x256xbf16, #tpu.memory_space<vmem>>, %arg3: memref<1x256xf32, #tpu.memory_space<vmem>>, %arg4: memref<256x64xbf16, #tpu.memory_space<vmem>>, %arg5: memref<1x64xf32, #tpu.memory_space<vmem>>, %arg6: memref<8x64xbf16, #tpu.memory_space<vmem>>) attributes {dimension_semantics = [#tpu.dimension_semantics<parallel>], iteration_bounds = array<i64: 1>, scalar_prefetch = 0 : i64, scratch_operands = 0 : i64, tpu.core_type = #tpu.core_type<tc>, window_params = [{transform_indices = @transform_0, window_bounds = array<i64: 8, 32>}, {pipeline_mode = #tpu.pipeline_mode<synchronous>, transform_indices = @transform_1, window_bounds = array<i64: 32, 256>}, {pipeline_mode = #tpu.pipeline_mode<synchronous>, transform_indices = @transform_2, window_bounds = array<i64: 1, 256>}, {pipeline_mode = #tpu.pipeline_mode<synchronous>, transform_indices = @transform_3, window_bounds = array<i64: 256, 64>}, {pipeline_mode = #tpu.pipeline_mode<synchronous>, transform_indices = @transform_4, window_bounds = array<i64: 1, 64>}, {transform_indices = @transform_5, window_bounds = array<i64: 8, 64>}]} {
    %c0 = arith.constant 0 : index
    %c0_0 = arith.constant 0 : index
    %0 = vector.load %arg1[%c0, %c0_0] : memref<8x32xf32, #tpu.memory_space<vmem>>, vector<8x32xf32>
    %1 = arith.truncf %0 : vector<8x32xf32> to vector<8x32xbf16>
    %c0_1 = arith.constant 0 : index
    %c0_2 = arith.constant 0 : index
    %2 = vector.load %arg2[%c0_1, %c0_2] : memref<32x256xbf16, #tpu.memory_space<vmem>>, vector<32x256xbf16>
    %cst = arith.constant dense<0.000000e+00> : vector<8x256xf32>
    %3 = tpu.matmul %1, %2, %cst {dimension_numbers = #tpu.dot_dimension_numbers<[1], [0], [0], [1], [0, 0, 1, 1], [], []>} : vector<8x32xbf16>, vector<32x256xbf16>, vector<8x256xf32> -> vector<8x256xf32>
    %c0_3 = arith.constant 0 : index
    %c0_4 = arith.constant 0 : index
    %4 = vector.load %arg3[%c0_3, %c0_4] : memref<1x256xf32, #tpu.memory_space<vmem>>, vector<1x256xf32>
    %5 = vector.broadcast %4 : vector<1x256xf32> to vector<8x256xf32>
    %6 = arith.addf %3, %5 : vector<8x256xf32>
    %cst_5 = arith.constant 0.000000e+00 : f32
    %7 = vector.broadcast %cst_5 : f32 to vector<8x256xf32>
    %8 = arith.maximumf %6, %7 : vector<8x256xf32>
    %9 = arith.truncf %8 : vector<8x256xf32> to vector<8x256xbf16>
    %c0_6 = arith.constant 0 : index
    %c0_7 = arith.constant 0 : index
    %10 = vector.load %arg4[%c0_6, %c0_7] : memref<256x64xbf16, #tpu.memory_space<vmem>>, vector<256x64xbf16>
    %cst_8 = arith.constant dense<0.000000e+00> : vector<8x64xf32>
    %11 = tpu.matmul %9, %10, %cst_8 {dimension_numbers = #tpu.dot_dimension_numbers<[1], [0], [0], [1], [0, 0, 1, 1], [], []>} : vector<8x256xbf16>, vector<256x64xbf16>, vector<8x64xf32> -> vector<8x64xf32>
    %c0_9 = arith.constant 0 : index
    %c0_10 = arith.constant 0 : index
    %12 = vector.load %arg5[%c0_9, %c0_10] : memref<1x64xf32, #tpu.memory_space<vmem>>, vector<1x64xf32>
    %13 = vector.broadcast %12 : vector<1x64xf32> to vector<8x64xf32>
    %14 = arith.addf %11, %13 : vector<8x64xf32>
    %15 = arith.truncf %14 : vector<8x64xf32> to vector<8x64xbf16>
    %c0_11 = arith.constant 0 : index
    %c0_12 = arith.constant 0 : index
    %16 = vector.load %arg6[%c0_11, %c0_12] : memref<8x64xbf16, #tpu.memory_space<vmem>>, vector<8x64xbf16>
    tpu.vector_store %arg6[%c0_11, %c0_12], %15 {strides = array<i32>} : memref<8x64xbf16, #tpu.memory_space<vmem>>, vector<8x64xbf16>,
    return
  }
  func.func @transform_0(%arg0: i32) -> (i32, i32) {
    %c0_i32 = arith.constant 0 : i32
    %c0_i32_0 = arith.constant 0 : i32
    return %arg0, %c0_i32 : i32, i32
  }
  func.func @transform_1(%arg0: i32) -> (i32, i32) {
    %c0_i32 = arith.constant 0 : i32
    %c0_i32_0 = arith.constant 0 : i32
    %c0_i32_1 = arith.constant 0 : i32
    return %c0_i32, %c0_i32_0 : i32, i32
  }
  func.func @transform_2(%arg0: i32) -> (i32, i32) {
    %c0_i32 = arith.constant 0 : i32
    %c0_i32_0 = arith.constant 0 : i32
    %c0_i32_1 = arith.constant 0 : i32
    return %c0_i32, %c0_i32_0 : i32, i32
  }
  func.func @transform_3(%arg0: i32) -> (i32, i32) {
    %c0_i32 = arith.constant 0 : i32
    %c0_i32_0 = arith.constant 0 : i32
    %c0_i32_1 = arith.constant 0 : i32
    return %c0_i32, %c0_i32_0 : i32, i32
  }
  func.func @transform_4(%arg0: i32) -> (i32, i32) {
    %c0_i32 = arith.constant 0 : i32
    %c0_i32_0 = arith.constant 0 : i32
    %c0_i32_1 = arith.constant 0 : i32
    return %c0_i32, %c0_i32_0 : i32, i32
  }
  func.func @transform_5(%arg0: i32) -> (i32, i32) {
    %c0_i32 = arith.constant 0 : i32
    %c0_i32_0 = arith.constant 0 : i32
    return %arg0, %c0_i32 : i32, i32
  }
}

</mosaic_0001>

<llo_original>
// kernel: tpu_custom_call.1
$region0: #{tpu_custom_call.1}
  #allocation0 [shape = 'u32[]', space=smem, size = 0x4, offset = 0x4, fixed_abs, tag = 'smem constant byte address 0x4 - core index']
  #allocation1 [shape = 'u32[144,128]{1,0:T(1,128)}', space=vmem, size = 0x12000, scoped, tag = 'internal scratch']
  %s0 = inlined_call_operand.vmem [shape: f32[8,32], index: 0, kind: input, shape index: {}]
  %s1 = inlined_call_operand.vmem [shape: bf16[32,256], index: 1, kind: input, shape index: {}]
  %s2 = inlined_call_operand.vmem [shape: f32[1,256], index: 2, kind: input, shape index: {}]
  %s3 = inlined_call_operand.vmem [shape: bf16[256,64], index: 3, kind: input, shape index: {}]
  %s4 = inlined_call_operand.vmem [shape: f32[1,64], index: 4, kind: input, shape index: {}]
  %s5 = inlined_call_operand.hbm [shape: bf16[8,64], index: 5, kind: output, shape index: {}]
  %s6 = sld [smem:[#allocation0]]
  $region30: #{tpu_custom_call.1} parent=0
    _
  %s8 = ssub.s32 1, %s6
  %s9 = scalar_select 0, %s8, %s6
  $region1: #{tpu_custom_call.1} parent=0
    #allocation2 [shape = 'u8[2048]{0}', space=vmem, size = 0x800, scoped, tag = 'output window, operand 0, single buffered']
    #allocation3 [shape = 's32[1]{0}', space=sflag, size = 0x4, scoped, tag = 'scoped memory for tpu_custom_call.1']
    %10 = vsyncpa [#allocation3], 0
    // Predicated region
    $region2: #{tpu_custom_call.1} parent=1 // pred_check
      _
    $region3: #{tpu_custom_call.1} parent=1 // pred_check_branch
      %12 = sbr.rel (0) target = $region5
    $region4: #{tpu_custom_call.1} parent=1 // pred_region
      _
    $region5: #{tpu_custom_call.1} parent=1 // pred_fallthru
      _
    // Predicated region
    $region6: #{tpu_custom_call.1} parent=1 // pred_check
      _
    $region7: #{tpu_custom_call.1} parent=1 // pred_check_branch
      %14 = sbr.rel (0) target = $region9
    $region8: #{tpu_custom_call.1} parent=1 // pred_region
      _
    $region9: #{tpu_custom_call.1} parent=1 // pred_fallthru
      _
    // Predicated region
    $region10: #{tpu_custom_call.1} parent=1 // pred_check
      _
    $region11: #{tpu_custom_call.1} parent=1 // pred_check_branch
      %16 = sbr.rel (0) target = $region13
    $region12: #{tpu_custom_call.1} parent=1 // pred_region
      _
    $region13: #{tpu_custom_call.1} parent=1 // pred_fallthru
      _
    // Predicated region
    $region14: #{tpu_custom_call.1} parent=1 // pred_check
      _
    $region15: #{tpu_custom_call.1} parent=1 // pred_check_branch
      %18 = sbr.rel (0) target = $region17
    $region16: #{tpu_custom_call.1} parent=1 // pred_region
      _
    $region17: #{tpu_custom_call.1} parent=1 // pred_fallthru
      _
    // Predicated region
    $region18: #{tpu_custom_call.1} parent=1 // pred_check
      _
    $region19: #{tpu_custom_call.1} parent=1 // pred_check_branch
      %20 = sbr.rel (0) target = $region21
    $region20: #{tpu_custom_call.1} parent=1 // pred_region
      _
    $region21: #{tpu_custom_call.1} parent=1 // pred_fallthru
      _
    %v22 = vld [vmem:[%s0] sm:$0xff]
    %v23 = vpack.c.bf16 %v22, %v22
    %v24 = vld [vmem:[%s1] sm:$0xff]
    %v25 = vld [vmem:[%s1 + $0x8] sm:$0xff]
    %v26 = vld [vmem:[%s1 + $0x10] sm:$0xff]
    %v27 = vld [vmem:[%s1 + $0x18] sm:$0xff]
    %v28 = vld [vmem:[%s2] sm:$0x3]
    %v30 = vlaneseq
    %v31 = vshrl.u32 %v30, 7
    %v32 = vsub.s32 0, %v31
    %v33 = vrot.slane %v28, %v32
    %v34 = vlaneseq
    %v35 = vshrl.u32 %v34, 7
    %v36 = vsub.s32 1, %v35
    %v37 = vrot.slane %v28, %v36
    %v44 = vunpack.c.l.b16 %v24
    %v45 = vunpack.c.h.b16 %v24
    %v46 = vunpack.c.l.b16 %v25
    %v47 = vunpack.c.h.b16 %v25
    %v48 = vunpack.c.l.b16 %v26
    %v49 = vunpack.c.h.b16 %v26
    %v50 = vunpack.c.l.b16 %v27
    %v51 = vunpack.c.h.b16 %v27
    %v52 = vpack.c.b16 %v46, %v44
    %v53 = vpack.c.b16 %v47, %v45
    %v54 = vpack.c.b16 %v50, %v48
    %v55 = vpack.c.b16 %v51, %v49
    %vm60 = vcmask 261120
    %v62 = vsel %vm60, %v23, 0
    %64 = vmatprep.subr.bf16.mxu0 %v53
    %65 = vmatpush1.bf16.msra.mxu0 %v52
    %66 = vmatprep.subr.bf16.mxu0 %v55
    %67 = vmatpush1.bf16.msra.mxu0 %v54
    %68 = vmatprep.subr.bf16.mxu0 0
    %69 = vmatpush1.bf16.msra.mxu0 0
    %70 = vmatprep.subr.bf16.mxu0 0
    %71 = vmatpush1.bf16.msra.mxu0 0
    %72 = vmatprep.subr.bf16.mxu0 0
    %73 = vmatpush1.bf16.msra.mxu0 0
    %74 = vmatprep.subr.bf16.mxu0 0
    %75 = vmatpush1.bf16.msra.mxu0 0
    %76 = vmatprep.subr.bf16.mxu0 0
    %77 = vmatpush1.bf16.msra.mxu0 0
    %78 = vmatprep.subr.bf16.mxu0 0
    %79 = vmatpush1.bf16.msra.mxu0 0
    %80 = vmatprep.subr.bf16.mxu0 0
    %81 = vmatpush1.bf16.msra.mxu0 0
    %82 = vmatprep.subr.bf16.mxu0 0
    %83 = vmatpush1.bf16.msra.mxu0 0
    %84 = vmatprep.subr.bf16.mxu0 0
    %85 = vmatpush1.bf16.msra.mxu0 0
    %86 = vmatprep.subr.bf16.mxu0 0
    %87 = vmatpush1.bf16.msra.mxu0 0
    %88 = vmatprep.subr.bf16.mxu0 0
    %89 = vmatpush1.bf16.msra.mxu0 0
    %90 = vmatprep.subr.bf16.mxu0 0
    %91 = vmatpush1.bf16.msra.mxu0 0
    %92 = vmatprep.subr.bf16.mxu0 0
    %93 = vmatpush1.bf16.msra.mxu0 0
    %94 = vmatprep.subr.bf16.mxu0 0
    %95 = vmatpush1.bf16.msra.mxu0 0
    %96 = vmatprep.mubr.bf16.mxu0 0
    %97 = vmatmul.mubr.bf16.gmra.mrb[0].mxu0 %v62
    %v98 = vpop.f32.mrb[0].mxu0
    %v99 = vadd.f32 %v33, %v98
    %v100 = vpop.f32.mrb[0].mxu0
    %v101 = vadd.f32 %v37, %v100
    %v102 = vpop.f32.mrb[0].mxu0
    %v103 = vpop.f32.mrb[0].mxu0
    %104 = vdwg.mxu0
    %v105 = vmax.f32 %v99, 0.0
    %v106 = vmax.f32 %v101, 0.0
    %v107 = vpack.c.bf16 %v105, %v105
    %v108 = vpack.c.bf16 %v106, %v106
    %v109 = vld [vmem:[%s3] sm:$0xf]
    %v110 = vld [vmem:[%s3 + $0x4] sm:$0xf]
    %v111 = vld [vmem:[%s3 + $0x8] sm:$0xf]
    %v112 = vld [vmem:[%s3 + $0xc] sm:$0xf]
    %v113 = vld [vmem:[%s3 + $0x10] sm:$0xf]
    %v114 = vld [vmem:[%s3 + $0x14] sm:$0xf]
    %v115 = vld [vmem:[%s3 + $0x18] sm:$0xf]
    %v116 = vld [vmem:[%s3 + $0x1c] sm:$0xf]
    %v117 = vld [vmem:[%s3 + $0x20] sm:$0xf]
    %v118 = vld [vmem:[%s3 + $0x24] sm:$0xf]
    %v119 = vld [vmem:[%s3 + $0x28] sm:$0xf]
    %v120 = vld [vmem:[%s3 + $0x2c] sm:$0xf]
    %v121 = vld [vmem:[%s3 + $0x30] sm:$0xf]
    %v122 = vld [vmem:[%s3 + $0x34] sm:$0xf]
    %v123 = vld [vmem:[%s3 + $0x38] sm:$0xf]
    %v124 = vld [vmem:[%s3 + $0x3c] sm:$0xf]
    %v125 = vld [vmem:[%s3 + $0x40] sm:$0xf]
    %v126 = vld [vmem:[%s3 + $0x44] sm:$0xf]
    %v127 = vld [vmem:[%s3 + $0x48] sm:$0xf]
    %v128 = vld [vmem:[%s3 + $0x4c] sm:$0xf]
    %v129 = vld [vmem:[%s3 + $0x50] sm:$0xf]
    %v130 = vld [vmem:[%s3 + $0x54] sm:$0xf]
    %v131 = vld [vmem:[%s3 + $0x58] sm:$0xf]
    %v132 = vld [vmem:[%s3 + $0x5c] sm:$0xf]
    %v133 = vld [vmem:[%s3 + $0x60] sm:$0xf]
    %v134 = vld [vmem:[%s3 + $0x64] sm:$0xf]
    %v135 = vld [vmem:[%s3 + $0x68] sm:$0xf]
    %v136 = vld [vmem:[%s3 + $0x6c] sm:$0xf]
    %v137 = vld [vmem:[%s3 + $0x70] sm:$0xf]
    %v138 = vld [vmem:[%s3 + $0x74] sm:$0xf]
    %v139 = vld [vmem:[%s3 + $0x78] sm:$0xf]
    %v140 = vld [vmem:[%s3 + $0x7c] sm:$0xf]
    %v141 = vld [vmem:[%s4] sm:$0x1]
    %v143 = vlaneseq
    %v144 = vshrl.u32 %v143, 7
    %v145 = vsub.s32 0, %v144
    %v146 = vrot.slane %v141, %v145
    %v180 = vunpack.c.l.b16 %v109
    %v181 = vunpack.c.l.b16 %v110
    %v182 = vunpack.c.l.b16 %v111
    %v183 = vunpack.c.l.b16 %v112
    %v184 = vunpack.c.l.b16 %v113
    %v185 = vunpack.c.l.b16 %v114
    %v186 = vunpack.c.l.b16 %v115
    %v187 = vunpack.c.l.b16 %v116
    %v188 = vunpack.c.l.b16 %v117
    %v189 = vunpack.c.l.b16 %v118
    %v190 = vunpack.c.l.b16 %v119
    %v191 = vunpack.c.l.b16 %v120
    %v192 = vunpack.c.l.b16 %v121
    %v193 = vunpack.c.l.b16 %v122
    %v194 = vunpack.c.l.b16 %v123
    %v195 = vunpack.c.l.b16 %v124
    %v196 = vunpack.c.l.b16 %v125
    %v197 = vunpack.c.l.b16 %v126
    %v198 = vunpack.c.l.b16 %v127
    %v199 = vunpack.c.l.b16 %v128
    %v200 = vunpack.c.l.b16 %v129
    %v201 = vunpack.c.l.b16 %v130
    %v202 = vunpack.c.l.b16 %v131
    %v203 = vunpack.c.l.b16 %v132
    %v204 = vunpack.c.l.b16 %v133
    %v205 = vunpack.c.l.b16 %v134
    %v206 = vunpack.c.l.b16 %v135
    %v207 = vunpack.c.l.b16 %v136
    %v208 = vunpack.c.l.b16 %v137
    %v209 = vunpack.c.l.b16 %v138
    %v210 = vunpack.c.l.b16 %v139
    %v211 = vunpack.c.l.b16 %v140
    %v212 = vpack.c.b16 %v181, %v180
    %v213 = vpack.c.b16 %v183, %v182
    %v214 = vpack.c.b16 %v185, %v184
    %v215 = vpack.c.b16 %v187, %v186
    %v216 = vpack.c.b16 %v189, %v188
    %v217 = vpack.c.b16 %v191, %v190
    %v218 = vpack.c.b16 %v193, %v192
    %v219 = vpack.c.b16 %v195, %v194
    %v220 = vpack.c.b16 %v197, %v196
    %v221 = vpack.c.b16 %v199, %v198
    %v222 = vpack.c.b16 %v201, %v200
    %v223 = vpack.c.b16 %v203, %v202
    %v224 = vpack.c.b16 %v205, %v204
    %v225 = vpack.c.b16 %v207, %v206
    %v226 = vpack.c.b16 %v209, %v208
    %v227 = vpack.c.b16 %v211, %v210
    %244 = vmatprep.subr.bf16.mxu0 0
    %245 = vmatpush1.bf16.msra.mxu0 %v212
    %246 = vmatprep.subr.bf16.mxu0 0
    %247 = vmatpush1.bf16.msra.mxu0 %v213
    %248 = vmatprep.subr.bf16.mxu0 0
    %249 = vmatpush1.bf16.msra.mxu0 %v214
    %250 = vmatprep.subr.bf16.mxu0 0
    %251 = vmatpush1.bf16.msra.mxu0 %v215
    %252 = vmatprep.subr.bf16.mxu0 0
    %253 = vmatpush1.bf16.msra.mxu0 %v216
    %254 = vmatprep.subr.bf16.mxu0 0
    %255 = vmatpush1.bf16.msra.mxu0 %v217
    %256 = vmatprep.subr.bf16.mxu0 0
    %257 = vmatpush1.bf16.msra.mxu0 %v218
    %258 = vmatprep.subr.bf16.mxu0 0
    %259 = vmatpush1.bf16.msra.mxu0 %v219
    %260 = vmatprep.subr.bf16.mxu0 0
    %261 = vmatpush1.bf16.msra.mxu0 %v220
    %262 = vmatprep.subr.bf16.mxu0 0
    %263 = vmatpush1.bf16.msra.mxu0 %v221
    %264 = vmatprep.subr.bf16.mxu0 0
    %265 = vmatpush1.bf16.msra.mxu0 %v222
    %266 = vmatprep.subr.bf16.mxu0 0
    %267 = vmatpush1.bf16.msra.mxu0 %v223
    %268 = vmatprep.subr.bf16.mxu0 0
    %269 = vmatpush1.bf16.msra.mxu0 %v224
    %270 = vmatprep.subr.bf16.mxu0 0
    %271 = vmatpush1.bf16.msra.mxu0 %v225
    %272 = vmatprep.subr.bf16.mxu0 0
    %273 = vmatpush1.bf16.msra.mxu0 %v226
    %274 = vmatprep.subr.bf16.mxu0 0
    %275 = vmatpush1.bf16.msra.mxu0 %v227
    %276 = vmatprep.mubr.bf16.mxu0 %v108
    %277 = vmatmul.mubr.bf16.gmra.mrb[0].mxu0 %v107
    %v278 = vpop.f32.mrb[0].mxu0
    %v279 = vadd.f32 %v146, %v278
    %v280 = vpop.f32.mrb[0].mxu0
    %v281 = vpop.f32.mrb[0].mxu0
    %v282 = vpop.f32.mrb[0].mxu0
    %283 = vdwg.mxu0
    %v284 = vpack.c.bf16 %v279, %v279
    %vm285 = vcmask 519168
    %286 = vst.msk [vmem:[#allocation2] sm:$0xf] %vm285, %v284
    // Predicated region
    $region22: #{tpu_custom_call.1} parent=1 // pred_check
      _
    $region23: #{tpu_custom_call.1} parent=1 // pred_check_branch
      %288 = sbr.rel (0) target = $region25
    $region24: #{tpu_custom_call.1} parent=1 // pred_region
      %s290 = ssub.s32 64, 64
      %291 = vsyncadd [#allocation3], %s290
      %s293 = sshll.u32 [#allocation2], 4
      %s294 = int_to_ptr.vmem [resolvable:$true] %s293
      %296 = dma.vmem_to_hbm [thread:$0]  %s294, 64, %s5, [#allocation3]
    $region25: #{tpu_custom_call.1} parent=1 // pred_fallthru
      _
    // Predicated region
    $region26: #{tpu_custom_call.1} parent=1 // pred_check
      _
    $region27: #{tpu_custom_call.1} parent=1 // pred_check_branch
      %298 = sbr.rel (0) target = $region29
    $region28: #{tpu_custom_call.1} parent=1 // pred_region
      %299 = dma.done [#allocation3], 64
    $region29: #{tpu_custom_call.1} parent=1 // pred_fallthru
      _
    %300 = vsyncpa [#allocation3], 1

</llo_original>
